<compile_context>
chip_gen: v6e
topology: v6e:2x2x1
jax: 0.10.0
libtpu: 0.0.40
codegen_flags: <defaults>
</compile_context>

<pallas_src>
import jax
import jax.numpy as jnp
from jax.experimental import pallas as pl
from jax.experimental.pallas import tpu as pltpu


def _round_up(a: int, b: int) -> int:
    return ((a + b - 1) // b) * b


def _cdiv(a: int, b: int) -> int:
    return -(-a // b)


def _vmem_capacity_bytes() -> int:
    """Per-core VMEM capacity; conservative 64 MiB (v7x) fallback."""
    try:
        info = pltpu.get_tpu_info()
        cap = getattr(info, "vmem_capacity_bytes", None)
        if cap:
            return int(cap)
    except Exception:
        pass
    return 64 << 20


def _prelu_kernel(x_ref, a_ref, o_ref):
    # a_ref is either (row_tile, 1) or (1, lane_tile); jnp broadcasting handles both.
    x = x_ref[...]
    a = a_ref[...].astype(x.dtype)
    o_ref[...] = jnp.where(x >= 0, x, a * x)


def _choose_tiles(rows, cols, dtype_bytes, sublane_mult, target_bytes):
    """Pick (row_tile, lane_tile) giving ~target_bytes lane-dense blocks.

    lane_tile is either == cols (full dim) or a multiple of 128; row_tile is either
    == rows (when rows < sublane_mult) or a multiple of sublane_mult. Ragged last
    blocks are handled by Pallas (masked writeback), so nothing needs to divide.
    """
    row_bytes = cols * dtype_bytes
    min_row_tile = min(rows, sublane_mult)

    if min_row_tile * row_bytes > target_bytes and cols > 128:
        # Very wide rows: minimal sublane tile, chop the lane axis into ~target chunks.
        row_tile = min_row_tile
        n_lane = max(2, _cdiv(min_row_tile * row_bytes, target_bytes))
        lane_tile = max(128, _round_up(_cdiv(cols, n_lane), 128))
    else:
        lane_tile = cols                       # full lane axis (always a legal block dim)
        if rows <= sublane_mult:
            row_tile = rows                    # full-dim row block
        else:
            row_tile = max(sublane_mult,
                           (target_bytes // max(row_bytes, 1)) // sublane_mult * sublane_mult)
            row_tile = min(row_tile, _round_up(rows, sublane_mult))

    # Guarantee >= 2 grid blocks where feasible so the work shards across both
    # TensorCores on v7x (harmless extra ~0.35us grid step on 1-TC chips).
    if _cdiv(rows, row_tile) * _cdiv(cols, lane_tile) == 1:
        if rows >= 2 * sublane_mult:
            row_tile = _round_up(_cdiv(rows, 2), sublane_mult)
        elif cols >= 256:
            lane_tile = max(128, _round_up(_cdiv(cols, 2), 128))

    return row_tile, lane_tile


def rep_relu(x: jax.Array, weight: jax.Array) -> jax.Array:
    """Pallas TPU implementation of RepReLU.forward: F.prelu(x, 1 - weight), x is NCHW."""
    N, C, H, W = x.shape
    assert weight.shape in ((C,), (1,)), "prelu weight must be per-channel (C,) or scalar (1,)"

    dtype_bytes = jnp.dtype(x.dtype).itemsize
    sublane_mult = {4: 8, 2: 16, 1: 32}.get(dtype_bytes, 8)

    # alpha = 1 - w, kept in f32 in HBM (cast to x.dtype per block inside the kernel).
    w = jnp.broadcast_to(weight, (C,)) if weight.shape == (1,) else weight
    alpha32 = (1.0 - w.astype(jnp.float32))

    hw = H * W
    if hw % 128 == 0:
        # Layout A: (N*C, H*W) -- last dim already lane-dense, alpha is per-row column.
        rows, cols = N * C, hw
        x2 = x.reshape(rows, cols)
        alpha_arr = jnp.broadcast_to(alpha32[None, :], (N, C)).reshape(rows, 1)
        alpha_is_lane_vector = False
    else:
        # Layout B: (N, C*H*W) -- fold C,H,W into the lane axis to stay lane-dense
        # (avoids masked vst partial stores for small / odd H*W); alpha becomes a
        # lane-vector with each channel's value repeated H*W times.
        rows, cols = N, C * hw
        x2 = x.reshape(rows, cols)
        alpha_arr = jnp.repeat(alpha32, hw).reshape(1, cols)
        alpha_is_lane_vector = True

    vmem_cap = _vmem_capacity_bytes()
    target_bytes = min(16 << 20, max(4 << 20, vmem_cap // 8))   # 8 MiB v7x, 16 MiB v5e/v6e

    row_tile, lane_tile = _choose_tiles(rows, cols, dtype_bytes, sublane_mult, target_bytes)

    # Ragged last blocks: no wrapper-side padding / slicing (saves a full HBM round trip);
    # Pallas masks the out-of-bounds portion of the output block on writeback.
    grid = (pl.cdiv(rows, row_tile), pl.cdiv(cols, lane_tile))

    if alpha_is_lane_vector:
        alpha_spec = pl.BlockSpec((1, lane_tile), lambda i, j: (0, j))
    else:
        alpha_spec = pl.BlockSpec((row_tile, 1), lambda i, j: (i, 0))

    # VMEM budget: double-buffered x + out blocks + alpha + headroom, capped per generation.
    block_bytes = row_tile * lane_tile * dtype_bytes
    vmem_limit = 4 * block_bytes + (6 << 20)
    vmem_limit = max(16 << 20, min(vmem_limit, vmem_cap * 3 // 4))

    cost = pl.CostEstimate(
        flops=2 * rows * cols,
        transcendentals=0,
        bytes_accessed=2 * rows * cols * dtype_bytes + alpha_arr.size * 4,
    )

    out2 = pl.pallas_call(
        _prelu_kernel,
        out_shape=jax.ShapeDtypeStruct((rows, cols), x.dtype),
        grid_spec=pltpu.PrefetchScalarGridSpec(
            num_scalar_prefetch=0,
            grid=grid,
            in_specs=[
                pl.BlockSpec((row_tile, lane_tile), lambda i, j: (i, j)),
                alpha_spec,
            ],
            out_specs=pl.BlockSpec((row_tile, lane_tile), lambda i, j: (i, j)),
        ),
        compiler_params=pltpu.CompilerParams(
            dimension_semantics=("parallel", "parallel"),
            vmem_limit_bytes=int(vmem_limit),
        ),
        cost_estimate=cost,
    )(x2, alpha_arr)

    return out2.reshape(N, C, H, W)


if __name__ == "__main__":
    key = jax.random.PRNGKey(0)
    kx, kw = jax.random.split(key)

    N, C, H, W = 2, 4, 16, 16
    x = jax.random.normal(kx, (N, C, H, W), dtype=jnp.float32)
    # Deterministic "init" tensor for RepReLU (per-channel), as in __init__(init=...)
    weight = jax.random.uniform(kw, (C,), dtype=jnp.float32, minval=0.0, maxval=0.5)

    out = jax.block_until_ready(rep_relu(x, weight))

    # Reference check (pure JAX) of F.prelu(x, 1 - weight) semantics.
    alpha = (1.0 - weight).reshape(1, C, 1, 1)
    ref = jnp.where(x >= 0, x, alpha * x)
    assert out.shape == x.shape and out.dtype == x.dtype
    assert jnp.allclose(out, ref, atol=1e-6, rtol=1e-6)

    print("KERNEL_OK")
</pallas_src>

<mosaic_0001>
module attributes {stable_mosaic.version = 11 : i64} {
  func.func @_prelu_kernel(%arg0: i32, %arg1: i32, %arg2: memref<8x128xf32, #tpu.memory_space<vmem>>, %arg3: memref<8x1xf32, #tpu.memory_space<vmem>>, %arg4: memref<8x128xf32, #tpu.memory_space<vmem>>) attributes {dimension_semantics = [#tpu.dimension_semantics<parallel>, #tpu.dimension_semantics<parallel>], iteration_bounds = array<i64: 1, 2>, scalar_prefetch = 0 : i64, scratch_operands = 0 : i64, tpu.core_type = #tpu.core_type<tc>, window_params = [{transform_indices = @transform_0, window_bounds = array<i64: 8, 128>}, {transform_indices = @transform_1, window_bounds = array<i64: 8, 1>}, {transform_indices = @transform_2, window_bounds = array<i64: 8, 128>}]} {
    %c0 = arith.constant 0 : index
    %c0_0 = arith.constant 0 : index
    %0 = vector.load %arg2[%c0, %c0_0] : memref<8x128xf32, #tpu.memory_space<vmem>>, vector<8x128xf32>
    %c0_1 = arith.constant 0 : index
    %c0_2 = arith.constant 0 : index
    %1 = vector.load %arg3[%c0_1, %c0_2] : memref<8x1xf32, #tpu.memory_space<vmem>>, vector<8x1xf32>
    %cst = arith.constant 0.000000e+00 : f32
    %2 = vector.broadcast %cst : f32 to vector<8x128xf32>
    %3 = arith.cmpf oge, %0, %2 : vector<8x128xf32>
    %4 = vector.broadcast %1 : vector<8x1xf32> to vector<8x128xf32>
    %5 = arith.mulf %4, %0 : vector<8x128xf32>
    %6 = arith.select %3, %0, %5 : vector<8x128xi1>, vector<8x128xf32>
    %c0_3 = arith.constant 0 : index
    %c0_4 = arith.constant 0 : index
    %7 = vector.load %arg4[%c0_3, %c0_4] : memref<8x128xf32, #tpu.memory_space<vmem>>, vector<8x128xf32>
    tpu.vector_store %arg4[%c0_3, %c0_4], %6 {strides = array<i32>} : memref<8x128xf32, #tpu.memory_space<vmem>>, vector<8x128xf32>,
    return
  }
  func.func @transform_0(%arg0: i32, %arg1: i32) -> (i32, i32) {
    %c0_i32 = arith.constant 0 : i32
    return %arg0, %arg1 : i32, i32
  }
  func.func @transform_1(%arg0: i32, %arg1: i32) -> (i32, i32) {
    %c0_i32 = arith.constant 0 : i32
    %c0_i32_0 = arith.constant 0 : i32
    return %arg0, %c0_i32 : i32, i32
  }
  func.func @transform_2(%arg0: i32, %arg1: i32) -> (i32, i32) {
    %c0_i32 = arith.constant 0 : i32
    return %arg0, %arg1 : i32, i32
  }
}

</mosaic_0001>

<llo_original>
// kernel: tpu_custom_call.1
$region0: #{tpu_custom_call.1}
  #allocation0 [shape = 'u32[]', space=smem, size = 0x4, offset = 0x4, fixed_abs, tag = 'smem constant byte address 0x4 - core index']
  #allocation1 [shape = 'u32[144,128]{1,0:T(1,128)}', space=vmem, size = 0x12000, scoped, tag = 'internal scratch']
  %s0 = inlined_call_operand.hbm [shape: f32[8,256], index: 0, kind: input, shape index: {}]
  %s1 = inlined_call_operand.vmem [shape: f32[8,1], index: 1, kind: input, shape index: {}]
  %s2 = inlined_call_operand.hbm [shape: f32[8,256], index: 2, kind: output, shape index: {}]
  %s3 = sld [smem:[#allocation0]]
  $region45: #{tpu_custom_call.1} parent=0
    _
  %s5 = ssub.s32 1, %s3
  %s6 = scalar_select 0, %s5, %s3
  $region1: #{tpu_custom_call.1} parent=0
    #allocation2 [shape = 'u8[8192]{0}', space=vmem, size = 0x2000, scoped, tag = 'input window, operand 0']
    #allocation3 [shape = 's32[2]{0}', space=sflag, size = 0x8, scoped, tag = 'scoped memory for tpu_custom_call.1']
    #allocation4 [shape = 's32[2]{0}', space=sflag, size = 0x8, scoped, tag = 'scoped memory for tpu_custom_call.1']
    #allocation5 [shape = 'u8[8192]{0}', space=vmem, size = 0x2000, scoped, tag = 'output window, operand 0']
    %7 = vsyncpa [#allocation3], 0
    %s8 = scalar_lea.sflag [#allocation3], 1
    %9 = vsyncpa %s8, 0
    %10 = vsyncpa [#allocation4], 0
    %s11 = scalar_lea.sflag [#allocation4], 1
    %12 = vsyncpa %s11, 0
    loop: start=0, step=1, limit=4
    $region2: #{tpu_custom_call.1} parent=1 // loop_pre_header
      _
    $region3: #{tpu_custom_call.1} parent=1 // loop_header
      %s14 = sphi 0, %s18
      %p15 = scmp.ge.s32.totalorder %s14, 4
      %s21 = sphi 0, %s33
      %s22 = sphi 0, %s29
      %s23 = sphi 0, %s21
      %s24 = sphi 0, %s22
      %s25 = sphi 0, %s23
      %s26 = sphi 0, %s24
      %s38 = sphi 0, %s40
      %s41 = sphi 0, %s38
      %s42 = sphi 0, %s41
      %s58 = sphi 0, %s42
      %s64 = sphi 0, %s66
      %s67 = sphi 0, %s64
      %s68 = sphi 0, %s67
      %s84 = sphi 0, %s68
      %s92 = sphi 0, %s94
      %s95 = sphi 0, %s92
      %s96 = sphi 0, %s95
      %s112 = sphi 0, %s96
    $region4: #{tpu_custom_call.1} parent=1 // loop_header_branch
      %17 = sbr.rel (%p15) target = $region8
    $region5: #{tpu_custom_call.1} parent=1 // loop_body
      %s19 = ssub.s32 %s14, 1
      %s20 = ssub.s32 %s14, 2
      %s27 = sadd.s32 1, %s22
      %p28 = scmp.ge.s32.totalorder %s27, 2
      %s29 = scalar_select %p28, 0, %s27
      %s30 = sadd.s32 1, %s21
      %s31 = scalar_select %p28, %s30, %s21
      %p32 = scmp.ge.s32.totalorder %s31, 1
      %s33 = scalar_select %p32, 0, %s31
      %s34 = ssub.s32 %s21, %s33
      %s35 = ssub.s32 %s22, %s29
      %s36 = sor.u32 %s34, %s35
      %p37 = scmp.eq.s32.totalorder %s36, 0
      %s39 = sadd.s32 %s38, 1
      %s40 = scalar_select %p37, %s38, %s39
      %p43 = pneg %p37
      %p44 = scmp.eq.s32.totalorder %s14, 1
      %p45 = por %p43, %p44
      %p46 = scmp.ne.s32.totalorder %s38, %s41
      %p47 = scmp.eq.s32.totalorder %s14, 0
      %p48 = por %p46, %p47
      %p49 = scmp.ne.s32.totalorder %s38, %s41
      %p50 = scmp.eq.s32.totalorder %s19, 1
      %p51 = por %p49, %p50
      %p52 = scmp.ne.s32.totalorder %s41, %s42
      %p53 = scmp.eq.s32.totalorder %s19, 0
      %p54 = por %p52, %p53
      %p55 = scmp.ne.s32.totalorder %s41, %s42
      %p56 = scmp.eq.s32.totalorder %s20, 1
      %p57 = por %p55, %p56
      %p59 = scmp.ne.s32.totalorder %s42, %s58
      %p60 = scmp.eq.s32.totalorder %s20, 0
      %p61 = por %p59, %p60
      %s62 = ssub.s32 %s21, %s33
      %p63 = scmp.eq.s32.totalorder %s62, 0
      %s65 = sadd.s32 %s64, 1
      %s66 = scalar_select %p63, %s64, %s65
      %p69 = pneg %p63
      %p70 = scmp.eq.s32.totalorder %s14, 1
      %p71 = por %p69, %p70
      %p72 = scmp.ne.s32.totalorder %s64, %s67
      %p73 = scmp.eq.s32.totalorder %s14, 0
      %p74 = por %p72, %p73
      %p75 = scmp.ne.s32.totalorder %s64, %s67
      %p76 = scmp.eq.s32.totalorder %s19, 1
      %p77 = por %p75, %p76
      %p78 = scmp.ne.s32.totalorder %s67, %s68
      %p79 = scmp.eq.s32.totalorder %s19, 0
      %p80 = por %p78, %p79
      %p81 = scmp.ne.s32.totalorder %s67, %s68
      %p82 = scmp.eq.s32.totalorder %s20, 1
      %p83 = por %p81, %p82
      %p85 = scmp.ne.s32.totalorder %s68, %s84
      %p86 = scmp.eq.s32.totalorder %s20, 0
      %p87 = por %p85, %p86
      %s88 = ssub.s32 %s21, %s33
      %s89 = ssub.s32 %s22, %s29
      %s90 = sor.u32 %s88, %s89
      %p91 = scmp.eq.s32.totalorder %s90, 0
      %s93 = sadd.s32 %s92, 1
      %s94 = scalar_select %p91, %s92, %s93
      %p97 = pneg %p91
      %p98 = scmp.eq.s32.totalorder %s14, 1
      %p99 = por %p97, %p98
      %p100 = scmp.ne.s32.totalorder %s92, %s95
      %p101 = scmp.eq.s32.totalorder %s14, 0
      %p102 = por %p100, %p101
      %p103 = scmp.ne.s32.totalorder %s92, %s95
      %p104 = scmp.eq.s32.totalorder %s19, 1
      %p105 = por %p103, %p104
      %p106 = scmp.ne.s32.totalorder %s95, %s96
      %p107 = scmp.eq.s32.totalorder %s19, 0
      %p108 = por %p106, %p107
      %p109 = scmp.ne.s32.totalorder %s95, %s96
      %p110 = scmp.eq.s32.totalorder %s20, 1
      %p111 = por %p109, %p110
      %p113 = scmp.ne.s32.totalorder %s96, %s112
      %p114 = scmp.eq.s32.totalorder %s20, 0
      %p115 = por %p113, %p114
      %p116 = scmp.le.s32.totalorder 1, %s14
      %p117 = scmp.lt.s32.totalorder %s14, 3
      %p118 = pnand %p116, %p117
      %p119 = pneg %p118
      // Predicated region
      $region9: #{tpu_custom_call.1} parent=5 // pred_check
        _
      $region10: #{tpu_custom_call.1} parent=5 // pred_check_branch
        %121 = sbr.rel (%p118) target = $region12
      $region11: #{tpu_custom_call.1} parent=5 // pred_region
        %s122 = ssub.s32 %s14, 1
        // Predicated region
        $region13: #{tpu_custom_call.1} parent=11 // pred_check
          %p123 = pneg %p80
        $region14: #{tpu_custom_call.1} parent=11 // pred_check_branch
          %125 = sbr.rel (%p123) target = $region16
        $region15: #{tpu_custom_call.1} parent=11 // pred_region
          %p126 = scmp.lt.s32.totalorder %s23, 0
          %s127 = scalar_select %p126, %s23, 0
          %s128 = smul.addr %s127, 8
          %s129 = scalar_lea.vmem %s1, %s128
        $region16: #{tpu_custom_call.1} parent=11 // pred_fallthru
          _
      $region12: #{tpu_custom_call.1} parent=5 // pred_fallthru
        _
      %p130 = scmp.lt.s32.totalorder %s14, 2
      // Predicated region
      $region17: #{tpu_custom_call.1} parent=5 // pred_check
        %p131 = pneg %p130
      $region18: #{tpu_custom_call.1} parent=5 // pred_check_branch
        %133 = sbr.rel (%p131) target = $region20
      $region19: #{tpu_custom_call.1} parent=5 // pred_region
        // Predicated region
        $region21: #{tpu_custom_call.1} parent=19 // pred_check
          %p134 = pneg %p48
        $region22: #{tpu_custom_call.1} parent=19 // pred_check_branch
          %136 = sbr.rel (%p134) target = $region24
        $region23: #{tpu_custom_call.1} parent=19 // pred_region
          %s137 = sand.u32 %s38, 1
          %s138 = scalar_lea.sflag [#allocation3], %s137
          %s139 = sand.u32 %s38, 1
          %s140 = smul.addr %s139, 8
          %s141 = scalar_lea.vmem [#allocation2], %s140
          %s143 = ssub.s32 128, 128
          %144 = vsyncadd %s138, %s143
          %s145 = smul.addr %s21, 2
          %s146 = sadd.s32 %s22, %s145
          %s147 = smul.addr %s146, 128
          %s148 = scalar_lea.hbm %s0, %s147
          %s150 = sshll.u32 %s141, 4
          %s151 = int_to_ptr.vmem [resolvable:$true] %s150
          %153 = dma.hbm_to_vmem [thread:$0]  %s148, 128, %s151, %s138
        $region24: #{tpu_custom_call.1} parent=19 // pred_fallthru
          _
      $region20: #{tpu_custom_call.1} parent=5 // pred_fallthru
        _
      %p154 = scmp.le.s32.totalorder 1, %s14
      %p155 = scmp.lt.s32.totalorder %s14, 3
      %p156 = pnand %p154, %p155
      %p157 = pneg %p156
      // Predicated region
      $region25: #{tpu_custom_call.1} parent=5 // pred_check
        _
      $region26: #{tpu_custom_call.1} parent=5 // pred_check_branch
        %159 = sbr.rel (%p156) target = $region28
      $region27: #{tpu_custom_call.1} parent=5 // pred_region
        %s160 = ssub.s32 %s14, 1
        %s161 = sand.u32 %s41, 1
        %s162 = scalar_lea.sflag [#allocation3], %s161
        %s163 = sand.u32 %s41, 1
        %s164 = smul.addr %s163, 8
        %s165 = scalar_lea.vmem [#allocation2], %s164
        // Predicated region
        $region29: #{tpu_custom_call.1} parent=27 // pred_check
          %p166 = pneg %p54
        $region30: #{tpu_custom_call.1} parent=27 // pred_check_branch
          %168 = sbr.rel (%p166) target = $region32
        $region31: #{tpu_custom_call.1} parent=27 // pred_region
          %169 = dma.done %s162, 128
        $region32: #{tpu_custom_call.1} parent=27 // pred_fallthru
          _
        %s170 = sand.u32 %s41, 1
        %s171 = scalar_lea.sflag [#allocation3], %s170
        %s172 = sand.u32 %s41, 1
        %s173 = smul.addr %s172, 8
        %s174 = scalar_lea.vmem [#allocation2], %s173
        %p175 = pneg %p54
        %p176 = pneg %p51
        %p177 = scmp.lt.s32.totalorder %s23, 0
        %s178 = scalar_select %p177, %s23, 0
        %s179 = smul.addr %s178, 8
        %s180 = scalar_lea.vmem %s1, %s179
        %p181 = pneg %p80
        %p182 = pneg %p77
        %p183 = pneg %p108
        %p184 = pneg %p105
        %s185 = sand.u32 %s95, 1
        %s186 = scalar_lea.sflag [#allocation4], %s185
        %s187 = sand.u32 %s95, 1
        %s188 = smul.addr %s187, 8
        %s189 = scalar_lea.vmem [#allocation5], %s188
        %p190 = scmp.lt.s32.totalorder %s23, 0
        %s191 = scalar_select %p190, %s23, 0
        %s192 = smul.addr %s191, 8
        %s193 = scalar_lea.vmem %s1, %s192
        %v194 = vld [vmem:[%s165] sm:$0xff]
        %v195 = vld [vmem:[%s193] sm:$0xff]
        %vm196 = vcmp.ge.f32.partialorder %v194, 0.0
        %198 = vset.pattern.permute.xlu0 0
        %199 = vperm.xlu0 %198, %v195
        %v200 = vpop.permute.xlu0 %199
        %v202 = vmul.f32 %v200, %v194
        %v203 = vsel %vm196, %v194, %v202
        %204 = vst [vmem:[%s189] sm:$0xff] %v203
        %s205 = sand.u32 %s95, 1
        %s206 = scalar_lea.sflag [#allocation4], %s205
        %s207 = sand.u32 %s95, 1
        %s208 = smul.addr %s207, 8
        %s209 = scalar_lea.vmem [#allocation5], %s208
        // Predicated region
        $region33: #{tpu_custom_call.1} parent=27 // pred_check
          %p210 = pneg %p105
        $region34: #{tpu_custom_call.1} parent=27 // pred_check_branch
          %212 = sbr.rel (%p210) target = $region36
        $region35: #{tpu_custom_call.1} parent=27 // pred_region
          %s214 = ssub.s32 128, 128
          %215 = vsyncadd %s206, %s214
          %s216 = smul.addr %s23, 2
          %s217 = sadd.s32 %s24, %s216
          %s218 = smul.addr %s217, 128
          %s219 = scalar_lea.hbm %s2, %s218
          %s221 = sshll.u32 %s209, 4
          %s222 = int_to_ptr.vmem [resolvable:$true] %s221
          %224 = dma.vmem_to_hbm [thread:$0]  %s222, 128, %s219, %s206
        $region36: #{tpu_custom_call.1} parent=27 // pred_fallthru
          _
      $region28: #{tpu_custom_call.1} parent=5 // pred_fallthru
        _
      %p225 = scmp.le.s32.totalorder 2, %s14
      // Predicated region
      $region37: #{tpu_custom_call.1} parent=5 // pred_check
        %p226 = pneg %p225
      $region38: #{tpu_custom_call.1} parent=5 // pred_check_branch
        %228 = sbr.rel (%p226) target = $region40
      $region39: #{tpu_custom_call.1} parent=5 // pred_region
        %s229 = ssub.s32 %s14, 2
        // Predicated region
        $region41: #{tpu_custom_call.1} parent=39 // pred_check
          %p230 = pneg %p111
        $region42: #{tpu_custom_call.1} parent=39 // pred_check_branch
          %232 = sbr.rel (%p230) target = $region44
        $region43: #{tpu_custom_call.1} parent=39 // pred_region
          %s233 = sand.u32 %s96, 1
          %s234 = scalar_lea.sflag [#allocation4], %s233
          %s235 = sand.u32 %s96, 1
          %s236 = smul.addr %s235, 8
          %s237 = scalar_lea.vmem [#allocation5], %s236
          %238 = dma.done %s234, 128
        $region44: #{tpu_custom_call.1} parent=39 // pred_fallthru
          _
      $region40: #{tpu_custom_call.1} parent=5 // pred_fallthru
        _
    $region6: #{tpu_custom_call.1} parent=1 // loop_footer
      %s18 = sadd.s32 1, %s14
    $region7: #{tpu_custom_call.1} parent=1 // loop_footer_branch
      %13 = sbr.rel target = $region3
    $region8: #{tpu_custom_call.1} parent=1 // loop_exit
      _
    %239 = vsyncpa [#allocation3], 1
    %s240 = scalar_lea.sflag [#allocation3], 1
    %241 = vsyncpa %s240, 1
    %242 = vsyncpa [#allocation4], 1
    %s243 = scalar_lea.sflag [#allocation4], 1
    %244 = vsyncpa %s243, 1

</llo_original>
